<compile_context>
chip_gen: v7x
topology: tpu7x:2x2x1
jax: 0.10.0
libtpu: 0.0.40
codegen_flags: <defaults>
</compile_context>

<pallas_src>
import functools

import jax
import jax.numpy as jnp
from jax.experimental import pallas as pl
from jax.experimental.pallas import tpu as pltpu


def _upsampler_kernel(x_ref, dup_ref, w_ref, b_ref, o_ref, *, width):
    """One grid step: `rows` input rows of one image -> 2*rows output rows.

    x_ref:   (1, C, Lb)     flat input pixels (Lb = rows*W), compute dtype
    dup_ref: (Lb, 4*Lb)     one-hot pixel-replication matrix (resident)
    w_ref:   (4*C, C)       stacked 1x1-conv weights, w_ref[s*C + c] = weight[4c + s]
    b_ref:   (C, 4*Lb)      per-output-lane bias (f32, resident)
    o_ref:   (1, C, 4*Lb)   output block; lane m = r*4W + i*2W + 2w + j,
                            i.e. already in pixel-shuffled NCHW order.
    """
    C = x_ref.shape[1]
    lanes = o_ref.shape[-1]                       # 4 * Lb
    four_w, two_w = 4 * width, 2 * width

    # Per-lane sub-pixel parity masks (a handful of vregs; VPU only).
    lane = jax.lax.broadcasted_iota(jnp.int32, (1, lanes), 1)
    j_is_one = (lane % 2) == 1                    # sub-pixel column parity
    i_is_one = (lane % four_w) >= two_w           # sub-pixel row parity

    # 1) Replicate every input pixel onto its 4 output lanes (MXU; exact,
    #    since each column of dup_ref is one-hot).
    xq = jnp.dot(x_ref[0], dup_ref[...],
                 preferred_element_type=jnp.float32).astype(x_ref.dtype)

    # 2) All four sub-pixel 1x1 convs in one stacked matmul, f32 accumulation.
    y4 = jnp.dot(w_ref[...], xq, preferred_element_type=jnp.float32)   # (4C, 4Lb)

    # 3) Per-lane select of the right weight set, bias add, SiLU (all f32).
    y_i0 = jnp.where(j_is_one, y4[1 * C:2 * C, :], y4[0 * C:1 * C, :])
    y_i1 = jnp.where(j_is_one, y4[3 * C:4 * C, :], y4[2 * C:3 * C, :])
    y = jnp.where(i_is_one, y_i1, y_i0) + b_ref[...]
    # SiLU: exp on the EUP; exact divide (pl.reciprocal(approx=True) is a
    # further micro-opt once looser tolerances are acceptable).
    y = y * pl.reciprocal(1.0 + jnp.exp(-y), approx=False)
    o_ref[0] = y.astype(o_ref.dtype)


def _vmem_budgets():
    """(physical VMEM, scoped vmem_limit_bytes, single-copy in+out block budget)."""
    try:
        cap = pltpu.get_tpu_info().vmem_capacity_bytes
    except Exception:  # not on TPU / attribute not available: assume v7x-sized
        cap = 64 * 1024 * 1024
    # v5e/v6e (128 MiB) -> 64 MiB scoped limit; v7x (64 MiB) -> 32 MiB.
    return cap, cap // 2, cap // 8


def _block_vmem_estimate(C, W, rows, in_isz, out_isz):
    Lb = rows * W
    in_blk = C * Lb * in_isz                       # x block
    out_blk = C * 4 * Lb * out_isz                 # output block
    resident = (Lb * 4 * Lb * in_isz               # replication matrix
                + 4 * C * C * in_isz               # stacked weights
                + C * 4 * Lb * 4)                  # per-lane bias (f32)
    temps = 40 * C * Lb * 4                        # xq, y4, selects, SiLU (f32)
    return 2 * (in_blk + out_blk) + resident + temps


def _pick_rows(N, C, H, W, in_isz, out_isz):
    """Input rows per grid step.

    Constraints: rows | H; Lb = rows*W a multiple of 128 (or the whole image)
    so both input and output blocks are (8,128)-legal and lane-dense; block +
    residents + f32 temps fit the generation-aware VMEM budget; Lb small
    enough that the replication matmul stays under the HBM roofline.  Prefer
    the largest block that still leaves >= 2 grid steps per v7x TensorCore.
    """
    _, vmem_limit, block_budget = _vmem_budgets()
    lb_cap = 512 if in_isz <= 2 else 256

    def lane_ok(r):
        return (r * W) % 128 == 0 or r * W == H * W

    def fits(r):
        single = C * r * W * in_isz + C * 4 * r * W * out_isz
        return (single <= block_budget and
                _block_vmem_estimate(C, W, r, in_isz, out_isz) <= int(0.75 * vmem_limit))

    divisors = [r for r in range(1, H + 1) if H % r == 0]
    valid = [r for r in divisors if lane_ok(r) and r * W <= lb_cap and fits(r)]
    if not valid:
        legal = [r for r in divisors if lane_ok(r) and fits(r)]
        if legal:
            return min(legal)
        return H  # whole-image fallback: always shape-legal (may be lane-padded)
    # >= 2 grid steps per TensorCore on dual-core parts (v7x): N*(H/rows) >= 4.
    pipelined = [r for r in valid if N * (H // r) >= 4]
    return max(pipelined) if pipelined else max(valid)


@functools.partial(jax.jit,
                   static_argnames=("rows_per_block", "compute_dtype", "out_dtype"))
def upsampler_pallas(x_nchw, weight, bias, *, rows_per_block=None,
                     compute_dtype=None, out_dtype=None):
    """x_nchw: (N, C, H, W); weight: (4C, C) (PyTorch 1x1 conv weight squeezed);
    bias: (4C,).  Returns (N, C, 2H, 2W) = silu(pixel_shuffle(conv1x1(x), 2))."""
    N, C, H, W = x_nchw.shape
    C4, Cin = weight.shape
    if C4 != 4 * C or Cin != C:
        raise ValueError(f"weight must be (4C, C); got {weight.shape} for C={C}")

    compute_dtype = x_nchw.dtype if compute_dtype is None else jnp.dtype(compute_dtype)
    out_dtype = x_nchw.dtype if out_dtype is None else jnp.dtype(out_dtype)
    in_isz = jnp.dtype(compute_dtype).itemsize
    out_isz = jnp.dtype(out_dtype).itemsize

    rows = rows_per_block
    if rows is None:
        rows = _pick_rows(N, C, H, W, in_isz, out_isz)
    if H % rows != 0 or not ((rows * W) % 128 == 0 or rows * W == H * W):
        raise ValueError(f"invalid rows_per_block={rows} for H={H}, W={W}")
    Lb = rows * W

    # Input prep: FREE metadata reshape only (the astype is a no-op when the
    # caller already supplies `compute_dtype`, which is the recommended path).
    xf = x_nchw.reshape(N, C, H * W).astype(compute_dtype)

    # Stacked 1x1-conv weights: w_stack[s*C + c, ci] = weight[4c + s, ci],
    # with s = 2*i + j indexing the (i, j) sub-pixel of the 2x2 shuffle.
    w_stack = weight.reshape(C, 4, C).transpose(1, 0, 2).reshape(4 * C, C)
    w_stack = w_stack.astype(compute_dtype)

    # Per-lane constants for one output block (lane m = r*4W + i*2W + 2w + j).
    m = jnp.arange(4 * Lb)
    pix = (m // (4 * W)) * W + (m % (2 * W)) // 2          # source pixel of lane m
    s_of_m = 2 * ((m % (4 * W)) // (2 * W)) + (m % 2)      # sub-pixel index of lane m
    # One-hot replication matrix: (x_blk @ dup)[:, m] == x_blk[:, pix[m]].
    dup = (pix[None, :] == jnp.arange(Lb)[:, None]).astype(compute_dtype)  # (Lb, 4Lb)
    # Per-lane bias: bias_blk[c, m] = bias[4c + s_of_m[m]]  (f32 epilogue).
    b4 = bias.astype(jnp.float32).reshape(C, 4).T                          # (4, C)
    bias_blk = b4[s_of_m, :].T                                             # (C, 4Lb)

    _, vmem_limit, _ = _vmem_budgets()
    grid = (N, H // rows)
    kernel = functools.partial(_upsampler_kernel, width=W)

    out_flat = pl.pallas_call(
        kernel,
        out_shape=jax.ShapeDtypeStruct((N, C, 4 * H * W), out_dtype),
        grid_spec=pltpu.PrefetchScalarGridSpec(
            num_scalar_prefetch=0,
            grid=grid,
            in_specs=[
                # activations: `rows` full image rows, all channels, flat lanes
                pl.BlockSpec((1, C, Lb), lambda n, hb: (n, 0, hb)),
                # replication matrix / weights / bias: resident (constant maps)
                pl.BlockSpec((Lb, 4 * Lb), lambda n, hb: (0, 0)),
                pl.BlockSpec((4 * C, C), lambda n, hb: (0, 0)),
                pl.BlockSpec((C, 4 * Lb), lambda n, hb: (0, 0)),
            ],
            out_specs=pl.BlockSpec((1, C, 4 * Lb), lambda n, hb: (n, 0, hb)),
        ),
        compiler_params=pltpu.CompilerParams(
            dimension_semantics=("parallel", "parallel"),
            vmem_limit_bytes=vmem_limit,
        ),
    )(xf, dup, w_stack, bias_blk)

    # (N, C, 4HW) -> (N, C, 2H, 2W): pure metadata (lane index is already
    # (2h+i)*2W + (2w+j)); no data movement.
    return out_flat.reshape(N, C, 2 * H, 2 * W)


def upsampler_ref(x_nchw, weight, bias):
    """Pure-JAX reference mirroring the PyTorch module."""
    N, C, H, W = x_nchw.shape
    y = jnp.einsum("nchw,oc->nohw", x_nchw, weight) + bias[None, :, None, None]
    y = y.reshape(N, C, 2, 2, H, W)
    y = jnp.transpose(y, (0, 1, 4, 2, 5, 3)).reshape(N, C, 2 * H, 2 * W)
    return y * jax.nn.sigmoid(y)


if __name__ == "__main__":
    key = jax.random.PRNGKey(0)
    k_x, k_w, k_b = jax.random.split(key, 3)

    N, C, H, W = 2, 4, 16, 16
    x = jax.random.normal(k_x, (N, C, H, W), dtype=jnp.float32)
    # Deterministic synthetic Conv2d(C, 4C, kernel_size=1) parameters.
    weight = jax.random.normal(k_w, (4 * C, C), dtype=jnp.float32) * 0.1
    bias = jax.random.normal(k_b, (4 * C,), dtype=jnp.float32) * 0.1

    ref = upsampler_ref(x, weight, bias)

    # f32 path (tight check)
    out = upsampler_pallas(x, weight, bias)
    out = jax.block_until_ready(out)
    assert out.shape == (N, C, 2 * H, 2 * W), out.shape
    assert jnp.allclose(out, ref, atol=2e-4, rtol=2e-4), "f32 mismatch vs reference"

    # bf16 I/O path (halves HBM bytes; f32 accumulation + f32 epilogue inside)
    out_bf16 = upsampler_pallas(x, weight, bias,
                                compute_dtype=jnp.bfloat16, out_dtype=jnp.bfloat16)
    out_bf16 = jax.block_until_ready(out_bf16)
    assert out_bf16.shape == (N, C, 2 * H, 2 * W), out_bf16.shape
    assert jnp.allclose(out_bf16.astype(jnp.float32), ref, atol=6e-2, rtol=6e-2), \
        "bf16 mismatch vs reference"

    print("KERNEL_OK")
</pallas_src>

<mosaic_0001>
module attributes {stable_mosaic.version = 11 : i64} {
  func.func @_upsampler_kernel(%arg0: i32, %arg1: i32, %arg2: memref<1x4x128xf32, #tpu.memory_space<vmem>>, %arg3: memref<128x512xf32, #tpu.memory_space<vmem>>, %arg4: memref<16x4xf32, #tpu.memory_space<vmem>>, %arg5: memref<4x512xf32, #tpu.memory_space<vmem>>, %arg6: memref<1x4x512xf32, #tpu.memory_space<vmem>>) attributes {dimension_semantics = [#tpu.dimension_semantics<parallel>, #tpu.dimension_semantics<parallel>], iteration_bounds = array<i64: 2, 2>, scalar_prefetch = 0 : i64, scratch_operands = 0 : i64, tpu.core_type = #tpu.core_type<tc>, window_params = [{transform_indices = @transform_0, window_bounds = array<i64: 1, 4, 128>}, {pipeline_mode = #tpu.pipeline_mode<synchronous>, transform_indices = @transform_1, window_bounds = array<i64: 128, 512>}, {pipeline_mode = #tpu.pipeline_mode<synchronous>, transform_indices = @transform_2, window_bounds = array<i64: 16, 4>}, {pipeline_mode = #tpu.pipeline_mode<synchronous>, transform_indices = @transform_3, window_bounds = array<i64: 4, 512>}, {transform_indices = @transform_4, window_bounds = array<i64: 1, 4, 512>}]} {
    %0 = tpu.iota {dimensions = array<i32: 1>} : vector<1x512xi32>
    %c2_i32 = arith.constant 2 : i32
    %c0_i32 = arith.constant 0 : i32
    %1 = arith.cmpi eq, %c2_i32, %c0_i32 : i32
    %c1_i32 = arith.constant 1 : i32
    %2 = arith.select %1, %c1_i32, %c2_i32 : i32
    %3 = vector.broadcast %2 : i32 to vector<1x512xi32>
    %4 = arith.remsi %0, %3 : vector<1x512xi32>
    %c0_i32_0 = arith.constant 0 : i32
    %5 = vector.broadcast %c0_i32_0 : i32 to vector<1x512xi32>
    %6 = arith.cmpi ne, %4, %5 : vector<1x512xi32>
    %c0_i32_1 = arith.constant 0 : i32
    %7 = vector.broadcast %c0_i32_1 : i32 to vector<1x512xi32>
    %8 = arith.cmpi slt, %4, %7 : vector<1x512xi32>
    %c0_i32_2 = arith.constant 0 : i32
    %9 = arith.cmpi slt, %2, %c0_i32_2 : i32
    %10 = vector.broadcast %9 : i1 to vector<1x512xi1>
    %11 = vector.broadcast %10 : vector<1x512xi1> to vector<1x512xi1>
    %12 = arith.xori %8, %11 : vector<1x512xi1>
    %13 = arith.andi %12, %6 : vector<1x512xi1>
    %14 = vector.broadcast %2 : i32 to vector<1x512xi32>
    %15 = arith.addi %4, %14 : vector<1x512xi32>
    %16 = arith.select %13, %15, %4 : vector<1x512xi1>, vector<1x512xi32>
    %c1_i32_3 = arith.constant 1 : i32
    %17 = vector.broadcast %c1_i32_3 : i32 to vector<1x512xi32>
    %18 = arith.cmpi eq, %16, %17 : vector<1x512xi32>
    %c64_i32 = arith.constant 64 : i32
    %c0_i32_4 = arith.constant 0 : i32
    %19 = arith.cmpi eq, %c64_i32, %c0_i32_4 : i32
    %c1_i32_5 = arith.constant 1 : i32
    %20 = arith.select %19, %c1_i32_5, %c64_i32 : i32
    %21 = vector.broadcast %20 : i32 to vector<1x512xi32>
    %22 = arith.remsi %0, %21 : vector<1x512xi32>
    %c0_i32_6 = arith.constant 0 : i32
    %23 = vector.broadcast %c0_i32_6 : i32 to vector<1x512xi32>
    %24 = arith.cmpi ne, %22, %23 : vector<1x512xi32>
    %c0_i32_7 = arith.constant 0 : i32
    %25 = vector.broadcast %c0_i32_7 : i32 to vector<1x512xi32>
    %26 = arith.cmpi slt, %22, %25 : vector<1x512xi32>
    %c0_i32_8 = arith.constant 0 : i32
    %27 = arith.cmpi slt, %20, %c0_i32_8 : i32
    %28 = vector.broadcast %27 : i1 to vector<1x512xi1>
    %29 = vector.broadcast %28 : vector<1x512xi1> to vector<1x512xi1>
    %30 = arith.xori %26, %29 : vector<1x512xi1>
    %31 = arith.andi %30, %24 : vector<1x512xi1>
    %32 = vector.broadcast %20 : i32 to vector<1x512xi32>
    %33 = arith.addi %22, %32 : vector<1x512xi32>
    %34 = arith.select %31, %33, %22 : vector<1x512xi1>, vector<1x512xi32>
    %c32_i32 = arith.constant 32 : i32
    %35 = vector.broadcast %c32_i32 : i32 to vector<1x512xi32>
    %36 = arith.cmpi sge, %34, %35 : vector<1x512xi32>
    %c0 = arith.constant 0 : index
    %c0_9 = arith.constant 0 : index
    %c0_10 = arith.constant 0 : index
    %37 = vector.load %arg2[%c0, %c0_9, %c0_10] : memref<1x4x128xf32, #tpu.memory_space<vmem>>, vector<1x4x128xf32>
    %38 = vector.shape_cast %37 : vector<1x4x128xf32> to vector<4x128xf32>
    %c0_11 = arith.constant 0 : index
    %c0_12 = arith.constant 0 : index
    %39 = vector.load %arg3[%c0_11, %c0_12] : memref<128x512xf32, #tpu.memory_space<vmem>>, vector<128x512xf32>
    %cst = arith.constant dense<0.000000e+00> : vector<4x512xf32>
    %40 = tpu.matmul %38, %39, %cst {dimension_numbers = #tpu.dot_dimension_numbers<[1], [0], [0], [1], [0, 0, 1, 1], [], []>} : vector<4x128xf32>, vector<128x512xf32>, vector<4x512xf32> -> vector<4x512xf32>
    %c0_13 = arith.constant 0 : index
    %c0_14 = arith.constant 0 : index
    %41 = vector.load %arg4[%c0_13, %c0_14] : memref<16x4xf32, #tpu.memory_space<vmem>>, vector<16x4xf32>
    %cst_15 = arith.constant dense<0.000000e+00> : vector<16x512xf32>
    %42 = tpu.matmul %41, %40, %cst_15 {dimension_numbers = #tpu.dot_dimension_numbers<[1], [0], [0], [1], [0, 0, 1, 1], [], []>} : vector<16x4xf32>, vector<4x512xf32>, vector<16x512xf32> -> vector<16x512xf32>
    %43 = vector.extract_strided_slice %42 {offsets = [4, 0], sizes = [4, 512], strides = [1, 1]} : vector<16x512xf32> to vector<4x512xf32>
    %44 = vector.extract_strided_slice %42 {offsets = [0, 0], sizes = [4, 512], strides = [1, 1]} : vector<16x512xf32> to vector<4x512xf32>
    %45 = vector.shape_cast %18 : vector<1x512xi1> to vector<1x512xi1>
    %46 = vector.broadcast %45 : vector<1x512xi1> to vector<4x512xi1>
    %47 = arith.select %46, %43, %44 : vector<4x512xi1>, vector<4x512xf32>
    %48 = vector.extract_strided_slice %42 {offsets = [12, 0], sizes = [4, 512], strides = [1, 1]} : vector<16x512xf32> to vector<4x512xf32>
    %49 = vector.extract_strided_slice %42 {offsets = [8, 0], sizes = [4, 512], strides = [1, 1]} : vector<16x512xf32> to vector<4x512xf32>
    %50 = vector.shape_cast %18 : vector<1x512xi1> to vector<1x512xi1>
    %51 = vector.broadcast %50 : vector<1x512xi1> to vector<4x512xi1>
    %52 = arith.select %51, %48, %49 : vector<4x512xi1>, vector<4x512xf32>
    %53 = vector.shape_cast %36 : vector<1x512xi1> to vector<1x512xi1>
    %54 = vector.broadcast %53 : vector<1x512xi1> to vector<4x512xi1>
    %55 = arith.select %54, %52, %47 : vector<4x512xi1>, vector<4x512xf32>
    %c0_16 = arith.constant 0 : index
    %c0_17 = arith.constant 0 : index
    %56 = vector.load %arg5[%c0_16, %c0_17] : memref<4x512xf32, #tpu.memory_space<vmem>>, vector<4x512xf32>
    %57 = arith.addf %55, %56 : vector<4x512xf32>
    %cst_18 = arith.constant 0.000000e+00 : f32
    %58 = vector.broadcast %cst_18 : f32 to vector<4x512xf32>
    %59 = arith.subf %58, %57 : vector<4x512xf32>
    %60 = math.exp %59 : vector<4x512xf32>
    %cst_19 = arith.constant 1.000000e+00 : f32
    %61 = vector.broadcast %cst_19 : f32 to vector<4x512xf32>
    %62 = arith.addf %61, %60 : vector<4x512xf32>
    %63 = tpu.reciprocal %62 : vector<4x512xf32> -> vector<4x512xf32>
    %64 = arith.mulf %57, %63 : vector<4x512xf32>
    %c0_20 = arith.constant 0 : index
    %c0_21 = arith.constant 0 : index
    %c0_22 = arith.constant 0 : index
    %65 = vector.load %arg6[%c0_20, %c0_21, %c0_22] : memref<1x4x512xf32, #tpu.memory_space<vmem>>, vector<1x4x512xf32>
    %66 = vector.shape_cast %65 : vector<1x4x512xf32> to vector<4x512xf32>
    %67 = vector.shape_cast %64 : vector<4x512xf32> to vector<1x4x512xf32>
    tpu.vector_store %arg6[%c0_20, %c0_21, %c0_22], %67 {strides = array<i32>} : memref<1x4x512xf32, #tpu.memory_space<vmem>>, vector<1x4x512xf32>,
    return
  }
  func.func @transform_0(%arg0: i32, %arg1: i32) -> (i32, i32, i32) {
    %c0_i32 = arith.constant 0 : i32
    %c0_i32_0 = arith.constant 0 : i32
    return %arg0, %c0_i32, %arg1 : i32, i32, i32
  }
  func.func @transform_1(%arg0: i32, %arg1: i32) -> (i32, i32) {
    %c0_i32 = arith.constant 0 : i32
    %c0_i32_0 = arith.constant 0 : i32
    %c0_i32_1 = arith.constant 0 : i32
    return %c0_i32, %c0_i32_0 : i32, i32
  }
  func.func @transform_2(%arg0: i32, %arg1: i32) -> (i32, i32) {
    %c0_i32 = arith.constant 0 : i32
    %c0_i32_0 = arith.constant 0 : i32
    %c0_i32_1 = arith.constant 0 : i32
    return %c0_i32, %c0_i32_0 : i32, i32
  }
  func.func @transform_3(%arg0: i32, %arg1: i32) -> (i32, i32) {
    %c0_i32 = arith.constant 0 : i32
    %c0_i32_0 = arith.constant 0 : i32
    %c0_i32_1 = arith.constant 0 : i32
    return %c0_i32, %c0_i32_0 : i32, i32
  }
  func.func @transform_4(%arg0: i32, %arg1: i32) -> (i32, i32, i32) {
    %c0_i32 = arith.constant 0 : i32
    %c0_i32_0 = arith.constant 0 : i32
    return %arg0, %c0_i32, %arg1 : i32, i32, i32
  }
}

</mosaic_0001>

<llo_original>
// kernel: upsampler_pallas.1
$region0: #{upsampler_pallas.1}
  #allocation0 [shape = 'u32[]', space=smem, size = 0x4, offset = 0x4, fixed_abs, tag = 'smem constant byte address 0x4 - core index']
  #allocation1 [shape = 'u32[144,128]{1,0:T(1,128)}', space=vmem, size = 0x12000, scoped, tag = 'internal scratch']
  %s0 = inlined_call_operand.vmem [shape: f32[2,4,256], index: 0, kind: input, shape index: {}]
  %s1 = inlined_call_operand.vmem [shape: f32[128,512], index: 1, kind: input, shape index: {}]
  %s2 = inlined_call_operand.vmem [shape: f32[16,4], index: 2, kind: input, shape index: {}]
  %s3 = inlined_call_operand.vmem [shape: f32[4,512], index: 3, kind: input, shape index: {}]
  %s4 = inlined_call_operand.vmem [shape: f32[2,4,1024], index: 4, kind: output, shape index: {}]
  %s5 = sld [smem:[#allocation0]]
  $region49: #{upsampler_pallas.1} parent=0
    _
  %s7 = ssub.s32 1, %s5
  %s8 = scalar_select 0, %s7, %s5
  loop: start=0, step=1, limit=6
  $region2: #{upsampler_pallas.1} parent=0 // loop_pre_header
    _
  $region3: #{upsampler_pallas.1} parent=0 // loop_header
    %s10 = sphi 0, %s14
    %p11 = scmp.ge.s32.totalorder %s10, 6
    %s17 = sphi 0, %s29
    %s18 = sphi 0, %s25
    %s19 = sphi 0, %s17
    %s20 = sphi 0, %s18
    %s21 = sphi 0, %s19
    %s22 = sphi 0, %s20
    %s34 = sphi 0, %s36
    %s37 = sphi 0, %s34
    %s38 = sphi 0, %s37
    %s54 = sphi 0, %s38
    %s58 = sphi 0, %s58
    %s60 = sphi 0, %s58
    %s61 = sphi 0, %s60
    %s75 = sphi 0, %s61
    %s79 = sphi 0, %s79
    %s81 = sphi 0, %s79
    %s82 = sphi 0, %s81
    %s96 = sphi 0, %s82
    %s100 = sphi 0, %s100
    %s102 = sphi 0, %s100
    %s103 = sphi 0, %s102
    %s117 = sphi 0, %s103
    %s125 = sphi 0, %s127
    %s128 = sphi 0, %s125
    %s129 = sphi 0, %s128
    %s145 = sphi 0, %s129
  $region4: #{upsampler_pallas.1} parent=0 // loop_header_branch
    %13 = sbr.rel (%p11) target = $region8
  $region5: #{upsampler_pallas.1} parent=0 // loop_body
    %s15 = ssub.s32 %s10, 1
    %s16 = ssub.s32 %s10, 2
    %s23 = sadd.s32 1, %s18
    %p24 = scmp.ge.s32.totalorder %s23, 2
    %s25 = scalar_select %p24, 0, %s23
    %s26 = sadd.s32 1, %s17
    %s27 = scalar_select %p24, %s26, %s17
    %p28 = scmp.ge.s32.totalorder %s27, 2
    %s29 = scalar_select %p28, 0, %s27
    %s30 = ssub.s32 %s17, %s29
    %s31 = ssub.s32 %s18, %s25
    %s32 = sor.u32 %s30, %s31
    %p33 = scmp.eq.s32.totalorder %s32, 0
    %s35 = sadd.s32 %s34, 1
    %s36 = scalar_select %p33, %s34, %s35
    %p39 = pneg %p33
    %p40 = scmp.eq.s32.totalorder %s10, 3
    %p41 = por %p39, %p40
    %p42 = scmp.ne.s32.totalorder %s34, %s37
    %p43 = scmp.eq.s32.totalorder %s10, 0
    %p44 = por %p42, %p43
    %p45 = scmp.ne.s32.totalorder %s34, %s37
    %p46 = scmp.eq.s32.totalorder %s15, 3
    %p47 = por %p45, %p46
    %p48 = scmp.ne.s32.totalorder %s37, %s38
    %p49 = scmp.eq.s32.totalorder %s15, 0
    %p50 = por %p48, %p49
    %p51 = scmp.ne.s32.totalorder %s37, %s38
    %p52 = scmp.eq.s32.totalorder %s16, 3
    %p53 = por %p51, %p52
    %p55 = scmp.ne.s32.totalorder %s38, %s54
    %p56 = scmp.eq.s32.totalorder %s16, 0
    %p57 = por %p55, %p56
    %s59 = sadd.s32 %s58, 1
    %p62 = scmp.eq.s32.totalorder %s10, 3
    %p63 = scmp.ne.s32.totalorder %s58, %s60
    %p64 = scmp.eq.s32.totalorder %s10, 0
    %p65 = por %p63, %p64
    %p66 = scmp.ne.s32.totalorder %s58, %s60
    %p67 = scmp.eq.s32.totalorder %s15, 3
    %p68 = por %p66, %p67
    %p69 = scmp.ne.s32.totalorder %s60, %s61
    %p70 = scmp.eq.s32.totalorder %s15, 0
    %p71 = por %p69, %p70
    %p72 = scmp.ne.s32.totalorder %s60, %s61
    %p73 = scmp.eq.s32.totalorder %s16, 3
    %p74 = por %p72, %p73
    %p76 = scmp.ne.s32.totalorder %s61, %s75
    %p77 = scmp.eq.s32.totalorder %s16, 0
    %p78 = por %p76, %p77
    %s80 = sadd.s32 %s79, 1
    %p83 = scmp.eq.s32.totalorder %s10, 3
    %p84 = scmp.ne.s32.totalorder %s79, %s81
    %p85 = scmp.eq.s32.totalorder %s10, 0
    %p86 = por %p84, %p85
    %p87 = scmp.ne.s32.totalorder %s79, %s81
    %p88 = scmp.eq.s32.totalorder %s15, 3
    %p89 = por %p87, %p88
    %p90 = scmp.ne.s32.totalorder %s81, %s82
    %p91 = scmp.eq.s32.totalorder %s15, 0
    %p92 = por %p90, %p91
    %p93 = scmp.ne.s32.totalorder %s81, %s82
    %p94 = scmp.eq.s32.totalorder %s16, 3
    %p95 = por %p93, %p94
    %p97 = scmp.ne.s32.totalorder %s82, %s96
    %p98 = scmp.eq.s32.totalorder %s16, 0
    %p99 = por %p97, %p98
    %s101 = sadd.s32 %s100, 1
    %p104 = scmp.eq.s32.totalorder %s10, 3
    %p105 = scmp.ne.s32.totalorder %s100, %s102
    %p106 = scmp.eq.s32.totalorder %s10, 0
    %p107 = por %p105, %p106
    %p108 = scmp.ne.s32.totalorder %s100, %s102
    %p109 = scmp.eq.s32.totalorder %s15, 3
    %p110 = por %p108, %p109
    %p111 = scmp.ne.s32.totalorder %s102, %s103
    %p112 = scmp.eq.s32.totalorder %s15, 0
    %p113 = por %p111, %p112
    %p114 = scmp.ne.s32.totalorder %s102, %s103
    %p115 = scmp.eq.s32.totalorder %s16, 3
    %p116 = por %p114, %p115
    %p118 = scmp.ne.s32.totalorder %s103, %s117
    %p119 = scmp.eq.s32.totalorder %s16, 0
    %p120 = por %p118, %p119
    %s121 = ssub.s32 %s17, %s29
    %s122 = ssub.s32 %s18, %s25
    %s123 = sor.u32 %s121, %s122
    %p124 = scmp.eq.s32.totalorder %s123, 0
    %s126 = sadd.s32 %s125, 1
    %s127 = scalar_select %p124, %s125, %s126
    %p130 = pneg %p124
    %p131 = scmp.eq.s32.totalorder %s10, 3
    %p132 = por %p130, %p131
    %p133 = scmp.ne.s32.totalorder %s125, %s128
    %p134 = scmp.eq.s32.totalorder %s10, 0
    %p135 = por %p133, %p134
    %p136 = scmp.ne.s32.totalorder %s125, %s128
    %p137 = scmp.eq.s32.totalorder %s15, 3
    %p138 = por %p136, %p137
    %p139 = scmp.ne.s32.totalorder %s128, %s129
    %p140 = scmp.eq.s32.totalorder %s15, 0
    %p141 = por %p139, %p140
    %p142 = scmp.ne.s32.totalorder %s128, %s129
    %p143 = scmp.eq.s32.totalorder %s16, 3
    %p144 = por %p142, %p143
    %p146 = scmp.ne.s32.totalorder %s129, %s145
    %p147 = scmp.eq.s32.totalorder %s16, 0
    %p148 = por %p146, %p147
    %p149 = scmp.le.s32.totalorder 1, %s10
    %p150 = scmp.lt.s32.totalorder %s10, 5
    %p151 = pnand %p149, %p150
    %p152 = pneg %p151
    // Predicated region
    $region9: #{upsampler_pallas.1} parent=5 // pred_check
      _
    $region10: #{upsampler_pallas.1} parent=5 // pred_check_branch
      %154 = sbr.rel (%p151) target = $region12
    $region11: #{upsampler_pallas.1} parent=5 // pred_region
      %s155 = ssub.s32 %s10, 1
      // Predicated region
      $region13: #{upsampler_pallas.1} parent=11 // pred_check
        %p156 = pneg %p71
      $region14: #{upsampler_pallas.1} parent=11 // pred_check_branch
        %158 = sbr.rel (%p156) target = $region16
      $region15: #{upsampler_pallas.1} parent=11 // pred_region
        _
      $region16: #{upsampler_pallas.1} parent=11 // pred_fallthru
        _
      // Predicated region
      $region17: #{upsampler_pallas.1} parent=11 // pred_check
        %p159 = pneg %p92
      $region18: #{upsampler_pallas.1} parent=11 // pred_check_branch
        %161 = sbr.rel (%p159) target = $region20
      $region19: #{upsampler_pallas.1} parent=11 // pred_region
        _
      $region20: #{upsampler_pallas.1} parent=11 // pred_fallthru
        _
      // Predicated region
      $region21: #{upsampler_pallas.1} parent=11 // pred_check
        %p162 = pneg %p113
      $region22: #{upsampler_pallas.1} parent=11 // pred_check_branch
        %164 = sbr.rel (%p162) target = $region24
      $region23: #{upsampler_pallas.1} parent=11 // pred_region
        _
      $region24: #{upsampler_pallas.1} parent=11 // pred_fallthru
        _
    $region12: #{upsampler_pallas.1} parent=5 // pred_fallthru
      _
    %p165 = scmp.lt.s32.totalorder %s10, 4
    // Predicated region
    $region25: #{upsampler_pallas.1} parent=5 // pred_check
      %p166 = pneg %p165
    $region26: #{upsampler_pallas.1} parent=5 // pred_check_branch
      %168 = sbr.rel (%p166) target = $region28
    $region27: #{upsampler_pallas.1} parent=5 // pred_region
      // Predicated region
      $region29: #{upsampler_pallas.1} parent=27 // pred_check
        %p169 = pneg %p44
      $region30: #{upsampler_pallas.1} parent=27 // pred_check_branch
        %171 = sbr.rel (%p169) target = $region32
      $region31: #{upsampler_pallas.1} parent=27 // pred_region
        %p172 = scmp.lt.s32.totalorder %s17, 1
        %s173 = scalar_select %p172, %s17, 1
        %p174 = scmp.lt.s32.totalorder %s18, 1
        %s175 = scalar_select %p174, %s18, 1
        %s176 = smul.addr %s173, 2
        %s177 = sadd.s32 %s175, %s176
        %s178 = smul.addr %s177, 4
        %s179 = scalar_lea.vmem %s0, %s178
      $region32: #{upsampler_pallas.1} parent=27 // pred_fallthru
        _
    $region28: #{upsampler_pallas.1} parent=5 // pred_fallthru
      _
    %p180 = scmp.le.s32.totalorder 1, %s10
    %p181 = scmp.lt.s32.totalorder %s10, 5
    %p182 = pnand %p180, %p181
    %p183 = pneg %p182
    // Predicated region
    $region33: #{upsampler_pallas.1} parent=5 // pred_check
      _
    $region34: #{upsampler_pallas.1} parent=5 // pred_check_branch
      %185 = sbr.rel (%p182) target = $region36
    $region35: #{upsampler_pallas.1} parent=5 // pred_region
      %s186 = ssub.s32 %s10, 1
      %p187 = scmp.lt.s32.totalorder %s19, 1
      %s188 = scalar_select %p187, %s19, 1
      %p189 = scmp.lt.s32.totalorder %s20, 1
      %s190 = scalar_select %p189, %s20, 1
      %s191 = smul.addr %s188, 2
      %s192 = sadd.s32 %s190, %s191
      %s193 = smul.addr %s192, 4
      %s194 = scalar_lea.vmem %s0, %s193
      %p195 = pneg %p50
      %p196 = pneg %p47
      %p197 = pneg %p71
      %p198 = pneg %p68
      %p199 = pneg %p92
      %p200 = pneg %p89
      %p201 = pneg %p113
      %p202 = pneg %p110
      %p203 = pneg %p141
      %p204 = pneg %p138
      %s205 = smul.u32 4, %s20
      %p206 = scmp.lt.s32.totalorder %s19, 1
      %s207 = scalar_select %p206, %s19, 1
      %p208 = scmp.lt.s32.totalorder %s205, 7
      %s209 = scalar_select %p208, %s205, 7
      %s210 = smul.addr %s207, 8
      %s211 = sadd.s32 %s209, %s210
      %s212 = smul.addr %s211, 4
      %s213 = scalar_lea.vmem %s4, %s212
      %p214 = scmp.lt.s32.totalorder %s19, 1
      %s215 = scalar_select %p214, %s19, 1
      %p216 = scmp.lt.s32.totalorder %s20, 1
      %s217 = scalar_select %p216, %s20, 1
      %s218 = smul.addr %s215, 2
      %s219 = sadd.s32 %s217, %s218
      %s220 = smul.addr %s219, 4
      %s221 = scalar_lea.vmem %s0, %s220
      %s222 = smul.u32 4, %s20
      %p223 = scmp.lt.s32.totalorder %s19, 1
      %s224 = scalar_select %p223, %s19, 1
      %p225 = scmp.lt.s32.totalorder %s222, 7
      %s226 = scalar_select %p225, %s222, 7
      %s227 = smul.addr %s224, 8
      %s228 = sadd.s32 %s226, %s227
      %s229 = smul.addr %s228, 4
      %s230 = scalar_lea.vmem %s4, %s229
      %s231 = smul.u32 4, %s20
      %v232 = vlaneseq
      %v233 = vand.u32 %v232, 127
      %v234 = vadd.s32 %v233, 128
      %v235 = vadd.s32 %v233, 256
      %v236 = vadd.s32 %v233, 384
      %vm237 = vcmp.lt.s32.totalorder %v233, 0
      %v238 = vsub.s32 0, %v233
      %v239 = vsel %vm237, %v238, %v233
      %v240 = vshrl.u32 %v239, 1
      %v241 = vand.u32 %v239, 1
      %v242 = vsub.s32 0, %v241
      %v243 = vsel %vm237, %v242, %v241
      %vm244 = vcmp.lt.s32.totalorder %v234, 0
      %v245 = vsub.s32 0, %v234
      %v246 = vsel %vm244, %v245, %v234
      %v247 = vshrl.u32 %v246, 1
      %v248 = vand.u32 %v246, 1
      %v249 = vsub.s32 0, %v248
      %v250 = vsel %vm244, %v249, %v248
      %vm251 = vcmp.lt.s32.totalorder %v235, 0
      %v252 = vsub.s32 0, %v235
      %v253 = vsel %vm251, %v252, %v235
      %v254 = vshrl.u32 %v253, 1
      %v255 = vand.u32 %v253, 1
      %v256 = vsub.s32 0, %v255
      %v257 = vsel %vm251, %v256, %v255
      %vm258 = vcmp.lt.s32.totalorder %v236, 0
      %v259 = vsub.s32 0, %v236
      %v260 = vsel %vm258, %v259, %v236
      %v261 = vshrl.u32 %v260, 1
      %v262 = vand.u32 %v260, 1
      %v263 = vsub.s32 0, %v262
      %v264 = vsel %vm258, %v263, %v262
      %vm265 = vcmp.ne.s32.totalorder %v243, 0
      %vm266 = vcmp.ne.s32.totalorder %v250, 0
      %vm267 = vcmp.ne.s32.totalorder %v257, 0
      %vm268 = vcmp.ne.s32.totalorder %v264, 0
      %vm269 = vcmp.lt.s32.totalorder %v243, 0
      %vm270 = vcmp.lt.s32.totalorder %v250, 0
      %vm271 = vcmp.lt.s32.totalorder %v257, 0
      %vm272 = vcmp.lt.s32.totalorder %v264, 0
      %vm273 = vmand %vm269, %vm265
      %vm274 = vmand %vm270, %vm266
      %vm275 = vmand %vm271, %vm267
      %vm276 = vmand %vm272, %vm268
      %v277 = vadd.s32 %v243, 2
      %v278 = vadd.s32 %v250, 2
      %v279 = vadd.s32 %v257, 2
      %v280 = vadd.s32 %v264, 2
      %v281 = vsel %vm273, %v277, %v243
      %v282 = vsel %vm274, %v278, %v250
      %v283 = vsel %vm275, %v279, %v257
      %v284 = vsel %vm276, %v280, %v264
      %vm285 = vcmp.eq.s32.totalorder %v281, 1
      %vm286 = vcmp.eq.s32.totalorder %v282, 1
      %vm287 = vcmp.eq.s32.totalorder %v283, 1
      %vm288 = vcmp.eq.s32.totalorder %v284, 1
      %vm289 = vcmp.lt.s32.totalorder %v233, 0
      %v290 = vsub.s32 0, %v233
      %v291 = vsel %vm289, %v290, %v233
      %v292 = vshrl.u32 %v291, 6
      %v293 = vand.u32 %v291, 63
      %v294 = vsub.s32 0, %v293
      %v295 = vsel %vm289, %v294, %v293
      %vm296 = vcmp.lt.s32.totalorder %v234, 0
      %v297 = vsub.s32 0, %v234
      %v298 = vsel %vm296, %v297, %v234
      %v299 = vshrl.u32 %v298, 6
      %v300 = vand.u32 %v298, 63
      %v301 = vsub.s32 0, %v300
      %v302 = vsel %vm296, %v301, %v300
      %vm303 = vcmp.lt.s32.totalorder %v235, 0
      %v304 = vsub.s32 0, %v235
      %v305 = vsel %vm303, %v304, %v235
      %v306 = vshrl.u32 %v305, 6
      %v307 = vand.u32 %v305, 63
      %v308 = vsub.s32 0, %v307
      %v309 = vsel %vm303, %v308, %v307
      %vm310 = vcmp.lt.s32.totalorder %v236, 0
      %v311 = vsub.s32 0, %v236
      %v312 = vsel %vm310, %v311, %v236
      %v313 = vshrl.u32 %v312, 6
      %v314 = vand.u32 %v312, 63
      %v315 = vsub.s32 0, %v314
      %v316 = vsel %vm310, %v315, %v314
      %vm317 = vcmp.ne.s32.totalorder %v295, 0
      %vm318 = vcmp.ne.s32.totalorder %v302, 0
      %vm319 = vcmp.ne.s32.totalorder %v309, 0
      %vm320 = vcmp.ne.s32.totalorder %v316, 0
      %vm321 = vcmp.lt.s32.totalorder %v295, 0
      %vm322 = vcmp.lt.s32.totalorder %v302, 0
      %vm323 = vcmp.lt.s32.totalorder %v309, 0
      %vm324 = vcmp.lt.s32.totalorder %v316, 0
      %vm325 = vmand %vm321, %vm317
      %vm326 = vmand %vm322, %vm318
      %vm327 = vmand %vm323, %vm319
      %vm328 = vmand %vm324, %vm320
      %v329 = vadd.s32 %v295, 64
      %v330 = vadd.s32 %v302, 64
      %v331 = vadd.s32 %v309, 64
      %v332 = vadd.s32 %v316, 64
      %v333 = vsel %vm325, %v329, %v295
      %v334 = vsel %vm326, %v330, %v302
      %v335 = vsel %vm327, %v331, %v309
      %v336 = vsel %vm328, %v332, %v316
      %vm337 = vcmp.ge.s32.totalorder %v333, 32
      %vm338 = vcmp.ge.s32.totalorder %v334, 32
      %vm339 = vcmp.ge.s32.totalorder %v335, 32
      %vm340 = vcmp.ge.s32.totalorder %v336, 32
      %v341 = vld [vmem:[%s221] sm:$0xf]
      %v342 = vld [vmem:[%s1] sm:$0xff]
      %v343 = vld [vmem:[%s1 + $0x8] sm:$0xff]
      %v344 = vld [vmem:[%s1 + $0x10] sm:$0xff]
      %v345 = vld [vmem:[%s1 + $0x18] sm:$0xff]
      %v346 = vld [vmem:[%s1 + $0x20] sm:$0xff]
      %v347 = vld [vmem:[%s1 + $0x28] sm:$0xff]
      %v348 = vld [vmem:[%s1 + $0x30] sm:$0xff]
      %v349 = vld [vmem:[%s1 + $0x38] sm:$0xff]
      %v350 = vld [vmem:[%s1 + $0x40] sm:$0xff]
      %v351 = vld [vmem:[%s1 + $0x48] sm:$0xff]
      %v352 = vld [vmem:[%s1 + $0x50] sm:$0xff]
      %v353 = vld [vmem:[%s1 + $0x58] sm:$0xff]
      %v354 = vld [vmem:[%s1 + $0x60] sm:$0xff]
      %v355 = vld [vmem:[%s1 + $0x68] sm:$0xff]
      %v356 = vld [vmem:[%s1 + $0x70] sm:$0xff]
      %v357 = vld [vmem:[%s1 + $0x78] sm:$0xff]
      %v358 = vld [vmem:[%s1 + $0x80] sm:$0xff]
      %v359 = vld [vmem:[%s1 + $0x88] sm:$0xff]
      %v360 = vld [vmem:[%s1 + $0x90] sm:$0xff]
      %v361 = vld [vmem:[%s1 + $0x98] sm:$0xff]
      %v362 = vld [vmem:[%s1 + $0xa0] sm:$0xff]
      %v363 = vld [vmem:[%s1 + $0xa8] sm:$0xff]
      %v364 = vld [vmem:[%s1 + $0xb0] sm:$0xff]
      %v365 = vld [vmem:[%s1 + $0xb8] sm:$0xff]
      %v366 = vld [vmem:[%s1 + $0xc0] sm:$0xff]
      %v367 = vld [vmem:[%s1 + $0xc8] sm:$0xff]
      %v368 = vld [vmem:[%s1 + $0xd0] sm:$0xff]
      %v369 = vld [vmem:[%s1 + $0xd8] sm:$0xff]
      %v370 = vld [vmem:[%s1 + $0xe0] sm:$0xff]
      %v371 = vld [vmem:[%s1 + $0xe8] sm:$0xff]
      %v372 = vld [vmem:[%s1 + $0xf0] sm:$0xff]
      %v373 = vld [vmem:[%s1 + $0xf8] sm:$0xff]
      %v374 = vld [vmem:[%s1 + $0x100] sm:$0xff]
      %v375 = vld [vmem:[%s1 + $0x108] sm:$0xff]
      %v376 = vld [vmem:[%s1 + $0x110] sm:$0xff]
      %v377 = vld [vmem:[%s1 + $0x118] sm:$0xff]
      %v378 = vld [vmem:[%s1 + $0x120] sm:$0xff]
      %v379 = vld [vmem:[%s1 + $0x128] sm:$0xff]
      %v380 = vld [vmem:[%s1 + $0x130] sm:$0xff]
      %v381 = vld [vmem:[%s1 + $0x138] sm:$0xff]
      %v382 = vld [vmem:[%s1 + $0x140] sm:$0xff]
      %v383 = vld [vmem:[%s1 + $0x148] sm:$0xff]
      %v384 = vld [vmem:[%s1 + $0x150] sm:$0xff]
      %v385 = vld [vmem:[%s1 + $0x158] sm:$0xff]
      %v386 = vld [vmem:[%s1 + $0x160] sm:$0xff]
      %v387 = vld [vmem:[%s1 + $0x168] sm:$0xff]
      %v388 = vld [vmem:[%s1 + $0x170] sm:$0xff]
      %v389 = vld [vmem:[%s1 + $0x178] sm:$0xff]
      %v390 = vld [vmem:[%s1 + $0x180] sm:$0xff]
      %v391 = vld [vmem:[%s1 + $0x188] sm:$0xff]
      %v392 = vld [vmem:[%s1 + $0x190] sm:$0xff]
      %v393 = vld [vmem:[%s1 + $0x198] sm:$0xff]
      %v394 = vld [vmem:[%s1 + $0x1a0] sm:$0xff]
      %v395 = vld [vmem:[%s1 + $0x1a8] sm:$0xff]
      %v396 = vld [vmem:[%s1 + $0x1b0] sm:$0xff]
      %v397 = vld [vmem:[%s1 + $0x1b8] sm:$0xff]
      %v398 = vld [vmem:[%s1 + $0x1c0] sm:$0xff]
      %v399 = vld [vmem:[%s1 + $0x1c8] sm:$0xff]
      %v400 = vld [vmem:[%s1 + $0x1d0] sm:$0xff]
      %v401 = vld [vmem:[%s1 + $0x1d8] sm:$0xff]
      %v402 = vld [vmem:[%s1 + $0x1e0] sm:$0xff]
      %v403 = vld [vmem:[%s1 + $0x1e8] sm:$0xff]
      %v404 = vld [vmem:[%s1 + $0x1f0] sm:$0xff]
      %v405 = vld [vmem:[%s1 + $0x1f8] sm:$0xff]
      %406 = vmatprep.subr.mxu0 %v343
      %407 = vmatpush1.msra.mxu0 %v342
      %408 = vmatprep.subr.mxu0 %v347
      %409 = vmatpush1.msra.mxu0 %v346
      %410 = vmatprep.subr.mxu0 %v351
      %411 = vmatpush1.msra.mxu0 %v350
      %412 = vmatprep.subr.mxu0 %v355
      %413 = vmatpush1.msra.mxu0 %v354
      %414 = vmatprep.subr.mxu0 %v359
      %415 = vmatpush1.msra.mxu0 %v358
      %416 = vmatprep.subr.mxu0 %v363
      %417 = vmatpush1.msra.mxu0 %v362
      %418 = vmatprep.subr.mxu0 %v367
      %419 = vmatpush1.msra.mxu0 %v366
      %420 = vmatprep.subr.mxu0 %v371
      %421 = vmatpush1.msra.mxu0 %v370
      %422 = vmatprep.subr.mxu0 %v375
      %423 = vmatpush1.msra.mxu0 %v374
      %424 = vmatprep.subr.mxu0 %v379
      %425 = vmatpush1.msra.mxu0 %v378
      %426 = vmatprep.subr.mxu0 %v383
      %427 = vmatpush1.msra.mxu0 %v382
      %428 = vmatprep.subr.mxu0 %v387
      %429 = vmatpush1.msra.mxu0 %v386
      %430 = vmatprep.subr.mxu0 %v391
      %431 = vmatpush1.msra.mxu0 %v390
      %432 = vmatprep.subr.mxu0 %v395
      %433 = vmatpush1.msra.mxu0 %v394
      %434 = vmatprep.subr.mxu0 %v399
      %435 = vmatpush1.msra.mxu0 %v398
      %436 = vmatprep.subr.mxu0 %v403
      %437 = vmatpush1.msra.mxu0 %v402
      %438 = vmatprep.subr.mxu0 0.0
      %439 = vmatpush1.msra.mxu0 0.0
      %440 = vmatprep.subr.mxu0 0.0
      %441 = vmatpush1.msra.mxu0 0.0
      %442 = vmatprep.subr.mxu0 0.0
      %443 = vmatpush1.msra.mxu0 0.0
      %444 = vmatprep.subr.mxu0 0.0
      %445 = vmatpush1.msra.mxu0 0.0
      %446 = vmatprep.subr.mxu0 0.0
      %447 = vmatpush1.msra.mxu0 0.0
      %448 = vmatprep.subr.mxu0 0.0
      %449 = vmatpush1.msra.mxu0 0.0
      %450 = vmatprep.subr.mxu0 0.0
      %451 = vmatpush1.msra.mxu0 0.0
      %452 = vmatprep.subr.mxu0 0.0
      %453 = vmatpush1.msra.mxu0 0.0
      %454 = vmatprep.subr.mxu0 0.0
      %455 = vmatpush1.msra.mxu0 0.0
      %456 = vmatprep.subr.mxu0 0.0
      %457 = vmatpush1.msra.mxu0 0.0
      %458 = vmatprep.subr.mxu0 0.0
      %459 = vmatpush1.msra.mxu0 0.0
      %460 = vmatprep.subr.mxu0 0.0
      %461 = vmatpush1.msra.mxu0 0.0
      %462 = vmatprep.subr.mxu0 0.0
      %463 = vmatpush1.msra.mxu0 0.0
      %464 = vmatprep.subr.mxu0 0.0
      %465 = vmatpush1.msra.mxu0 0.0
      %466 = vmatprep.subr.mxu0 0.0
      %467 = vmatpush1.msra.mxu0 0.0
      %468 = vmatprep.subr.mxu0 0.0
      %469 = vmatpush1.msra.mxu0 0.0
      %470 = vmatprep.mubr.f32.mxu0 0.0
      %471 = vmatmul.mubr.f32.gmra.mrb[0].mxu0 %v341
      %v472 = vpop.f32.mrb[0].mxu0
      %v473 = vadd.f32 0.0, %v472
      %v474 = vpop.f32.mrb[0].mxu0
      %v475 = vadd.f32 0.0, %v474
      %476 = vdwg.mxu0
      %477 = vmatprep.subr.mxu0 %v345
      %478 = vmatpush1.msra.mxu0 %v344
      %479 = vmatprep.subr.mxu0 %v349
      %480 = vmatpush1.msra.mxu0 %v348
      %481 = vmatprep.subr.mxu0 %v353
      %482 = vmatpush1.msra.mxu0 %v352
      %483 = vmatprep.subr.mxu0 %v357
      %484 = vmatpush1.msra.mxu0 %v356
      %485 = vmatprep.subr.mxu0 %v361
      %486 = vmatpush1.msra.mxu0 %v360
      %487 = vmatprep.subr.mxu0 %v365
      %488 = vmatpush1.msra.mxu0 %v364
      %489 = vmatprep.subr.mxu0 %v369
      %490 = vmatpush1.msra.mxu0 %v368
      %491 = vmatprep.subr.mxu0 %v373
      %492 = vmatpush1.msra.mxu0 %v372
      %493 = vmatprep.subr.mxu0 %v377
      %494 = vmatpush1.msra.mxu0 %v376
      %495 = vmatprep.subr.mxu0 %v381
      %496 = vmatpush1.msra.mxu0 %v380
      %497 = vmatprep.subr.mxu0 %v385
      %498 = vmatpush1.msra.mxu0 %v384
      %499 = vmatprep.subr.mxu0 %v389
      %500 = vmatpush1.msra.mxu0 %v388
      %501 = vmatprep.subr.mxu0 %v393
      %502 = vmatpush1.msra.mxu0 %v392
      %503 = vmatprep.subr.mxu0 %v397
      %504 = vmatpush1.msra.mxu0 %v396
      %505 = vmatprep.subr.mxu0 %v401
      %506 = vmatpush1.msra.mxu0 %v400
      %507 = vmatprep.subr.mxu0 %v405
      %508 = vmatpush1.msra.mxu0 %v404
      %509 = vmatprep.subr.mxu0 0.0
      %510 = vmatpush1.msra.mxu0 0.0
      %511 = vmatprep.subr.mxu0 0.0
      %512 = vmatpush1.msra.mxu0 0.0
      %513 = vmatprep.subr.mxu0 0.0
      %514 = vmatpush1.msra.mxu0 0.0
      %515 = vmatprep.subr.mxu0 0.0
      %516 = vmatpush1.msra.mxu0 0.0
      %517 = vmatprep.subr.mxu0 0.0
      %518 = vmatpush1.msra.mxu0 0.0
      %519 = vmatprep.subr.mxu0 0.0
      %520 = vmatpush1.msra.mxu0 0.0
      %521 = vmatprep.subr.mxu0 0.0
      %522 = vmatpush1.msra.mxu0 0.0
      %523 = vmatprep.subr.mxu0 0.0
      %524 = vmatpush1.msra.mxu0 0.0
      %525 = vmatprep.subr.mxu0 0.0
      %526 = vmatpush1.msra.mxu0 0.0
      %527 = vmatprep.subr.mxu0 0.0
      %528 = vmatpush1.msra.mxu0 0.0
      %529 = vmatprep.subr.mxu0 0.0
      %530 = vmatpush1.msra.mxu0 0.0
      %531 = vmatprep.subr.mxu0 0.0
      %532 = vmatpush1.msra.mxu0 0.0
      %533 = vmatprep.subr.mxu0 0.0
      %534 = vmatpush1.msra.mxu0 0.0
      %535 = vmatprep.subr.mxu0 0.0
      %536 = vmatpush1.msra.mxu0 0.0
      %537 = vmatprep.subr.mxu0 0.0
      %538 = vmatpush1.msra.mxu0 0.0
      %539 = vmatprep.subr.mxu0 0.0
      %540 = vmatpush1.msra.mxu0 0.0
      %541 = vmatprep.mubr.f32.mxu0 0.0
      %542 = vmatmul.mubr.f32.gmra.mrb[0].mxu0 %v341
      %v543 = vpop.f32.mrb[0].mxu0
      %v544 = vadd.f32 0.0, %v543
      %v545 = vpop.f32.mrb[0].mxu0
      %v546 = vadd.f32 0.0, %v545
      %547 = vdwg.mxu0
      %v548 = vld [vmem:[%s2] sm:$0xff]
      %v549 = vld [vmem:[%s2 + $0x8] sm:$0xff]
      %vm550 = vcmask 31744
      %v552 = vsel %vm550, %v548, 0
      %v555 = vsel %vm550, %v549, 0
      %vm557 = vcmask 1043456
      %v559 = vsel %vm557, %v473, 0
      %v562 = vsel %vm557, %v475, 0
      %v565 = vsel %vm557, %v544, 0
      %v568 = vsel %vm557, %v546, 0
      %570 = vmatprep.subr.mxu0 %v562
      %571 = vmatpush1.msra.mxu0 %v559
      %572 = vmatprep.subr.mxu0 0.0
      %573 = vmatpush1.msra.mxu0 0.0
      %574 = vmatprep.subr.mxu0 0.0
      %575 = vmatpush1.msra.mxu0 0.0
      %576 = vmatprep.subr.mxu0 0.0
      %577 = vmatpush1.msra.mxu0 0.0
      %578 = vmatprep.subr.mxu0 0.0
      %579 = vmatpush1.msra.mxu0 0.0
      %580 = vmatprep.subr.mxu0 0.0
      %581 = vmatpush1.msra.mxu0 0.0
      %582 = vmatprep.subr.mxu0 0.0
      %583 = vmatpush1.msra.mxu0 0.0
      %584 = vmatprep.subr.mxu0 0.0
      %585 = vmatpush1.msra.mxu0 0.0
      %586 = vmatprep.subr.mxu0 0.0
      %587 = vmatpush1.msra.mxu0 0.0
      %588 = vmatprep.subr.mxu0 0.0
      %589 = vmatpush1.msra.mxu0 0.0
      %590 = vmatprep.subr.mxu0 0.0
      %591 = vmatpush1.msra.mxu0 0.0
      %592 = vmatprep.subr.mxu0 0.0
      %593 = vmatpush1.msra.mxu0 0.0
      %594 = vmatprep.subr.mxu0 0.0
      %595 = vmatpush1.msra.mxu0 0.0
      %596 = vmatprep.subr.mxu0 0.0
      %597 = vmatpush1.msra.mxu0 0.0
      %598 = vmatprep.subr.mxu0 0.0
      %599 = vmatpush1.msra.mxu0 0.0
      %600 = vmatprep.subr.mxu0 0.0
      %601 = vmatpush1.msra.mxu0 0.0
      %602 = vmatprep.subr.mxu0 0.0
      %603 = vmatpush1.msra.mxu0 0.0
      %604 = vmatprep.subr.mxu0 0.0
      %605 = vmatpush1.msra.mxu0 0.0
      %606 = vmatprep.subr.mxu0 0.0
      %607 = vmatpush1.msra.mxu0 0.0
      %608 = vmatprep.subr.mxu0 0.0
      %609 = vmatpush1.msra.mxu0 0.0
      %610 = vmatprep.subr.mxu0 0.0
      %611 = vmatpush1.msra.mxu0 0.0
      %612 = vmatprep.subr.mxu0 0.0
      %613 = vmatpush1.msra.mxu0 0.0
      %614 = vmatprep.subr.mxu0 0.0
      %615 = vmatpush1.msra.mxu0 0.0
      %616 = vmatprep.subr.mxu0 0.0
      %617 = vmatpush1.msra.mxu0 0.0
      %618 = vmatprep.subr.mxu0 0.0
      %619 = vmatpush1.msra.mxu0 0.0
      %620 = vmatprep.subr.mxu0 0.0
      %621 = vmatpush1.msra.mxu0 0.0
      %622 = vmatprep.subr.mxu0 0.0
      %623 = vmatpush1.msra.mxu0 0.0
      %624 = vmatprep.subr.mxu0 0.0
      %625 = vmatpush1.msra.mxu0 0.0
      %626 = vmatprep.subr.mxu0 0.0
      %627 = vmatpush1.msra.mxu0 0.0
      %628 = vmatprep.subr.mxu0 0.0
      %629 = vmatpush1.msra.mxu0 0.0
      %630 = vmatprep.subr.mxu0 0.0
      %631 = vmatpush1.msra.mxu0 0.0
      %632 = vmatprep.subr.mxu0 0.0
      %633 = vmatpush1.msra.mxu0 0.0
      %634 = vmatprep.mubr.f32.mxu0 0.0
      %635 = vmatmul.mubr.f32.gmra.mrb[0].mxu0 %v552
      %v636 = vpop.f32.mrb[0].mxu0
      %v637 = vadd.f32 0.0, %v636
      %v638 = vpop.f32.mrb[0].mxu0
      %v639 = vadd.f32 0.0, %v638
      %640 = vmatprep.mubr.f32.mxu0 0.0
      %641 = vmatmul.mubr.f32.gmra.mrb[0].mxu0 %v555
      %v642 = vpop.f32.mrb[0].mxu0
      %v643 = vadd.f32 0.0, %v642
      %v644 = vpop.f32.mrb[0].mxu0
      %v645 = vadd.f32 0.0, %v644
      %646 = vdwg.mxu0
      %647 = vmatprep.subr.mxu0 %v568
      %648 = vmatpush1.msra.mxu0 %v565
      %649 = vmatprep.subr.mxu0 0.0
      %650 = vmatpush1.msra.mxu0 0.0
      %651 = vmatprep.subr.mxu0 0.0
      %652 = vmatpush1.msra.mxu0 0.0
      %653 = vmatprep.subr.mxu0 0.0
      %654 = vmatpush1.msra.mxu0 0.0
      %655 = vmatprep.subr.mxu0 0.0
      %656 = vmatpush1.msra.mxu0 0.0
      %657 = vmatprep.subr.mxu0 0.0
      %658 = vmatpush1.msra.mxu0 0.0
      %659 = vmatprep.subr.mxu0 0.0
      %660 = vmatpush1.msra.mxu0 0.0
      %661 = vmatprep.subr.mxu0 0.0
      %662 = vmatpush1.msra.mxu0 0.0
      %663 = vmatprep.subr.mxu0 0.0
      %664 = vmatpush1.msra.mxu0 0.0
      %665 = vmatprep.subr.mxu0 0.0
      %666 = vmatpush1.msra.mxu0 0.0
      %667 = vmatprep.subr.mxu0 0.0
      %668 = vmatpush1.msra.mxu0 0.0
      %669 = vmatprep.subr.mxu0 0.0
      %670 = vmatpush1.msra.mxu0 0.0
      %671 = vmatprep.subr.mxu0 0.0
      %672 = vmatpush1.msra.mxu0 0.0
      %673 = vmatprep.subr.mxu0 0.0
      %674 = vmatpush1.msra.mxu0 0.0
      %675 = vmatprep.subr.mxu0 0.0
      %676 = vmatpush1.msra.mxu0 0.0
      %677 = vmatprep.subr.mxu0 0.0
      %678 = vmatpush1.msra.mxu0 0.0
      %679 = vmatprep.subr.mxu0 0.0
      %680 = vmatpush1.msra.mxu0 0.0
      %681 = vmatprep.subr.mxu0 0.0
      %682 = vmatpush1.msra.mxu0 0.0
      %683 = vmatprep.subr.mxu0 0.0
      %684 = vmatpush1.msra.mxu0 0.0
      %685 = vmatprep.subr.mxu0 0.0
      %686 = vmatpush1.msra.mxu0 0.0
      %687 = vmatprep.subr.mxu0 0.0
      %688 = vmatpush1.msra.mxu0 0.0
      %689 = vmatprep.subr.mxu0 0.0
      %690 = vmatpush1.msra.mxu0 0.0
      %691 = vmatprep.subr.mxu0 0.0
      %692 = vmatpush1.msra.mxu0 0.0
      %693 = vmatprep.subr.mxu0 0.0
      %694 = vmatpush1.msra.mxu0 0.0
      %695 = vmatprep.subr.mxu0 0.0
      %696 = vmatpush1.msra.mxu0 0.0
      %697 = vmatprep.subr.mxu0 0.0
      %698 = vmatpush1.msra.mxu0 0.0
      %699 = vmatprep.subr.mxu0 0.0
      %700 = vmatpush1.msra.mxu0 0.0
      %701 = vmatprep.subr.mxu0 0.0
      %702 = vmatpush1.msra.mxu0 0.0
      %703 = vmatprep.subr.mxu0 0.0
      %704 = vmatpush1.msra.mxu0 0.0
      %705 = vmatprep.subr.mxu0 0.0
      %706 = vmatpush1.msra.mxu0 0.0
      %707 = vmatprep.subr.mxu0 0.0
      %708 = vmatpush1.msra.mxu0 0.0
      %709 = vmatprep.subr.mxu0 0.0
      %710 = vmatpush1.msra.mxu0 0.0
      %711 = vmatprep.mubr.f32.mxu0 0.0
      %712 = vmatmul.mubr.f32.gmra.mrb[0].mxu0 %v552
      %v713 = vpop.f32.mrb[0].mxu0
      %v714 = vadd.f32 0.0, %v713
      %v715 = vpop.f32.mrb[0].mxu0
      %v716 = vadd.f32 0.0, %v715
      %717 = vmatprep.mubr.f32.mxu0 0.0
      %718 = vmatmul.mubr.f32.gmra.mrb[0].mxu0 %v555
      %v719 = vpop.f32.mrb[0].mxu0
      %v720 = vadd.f32 0.0, %v719
      %v721 = vpop.f32.mrb[0].mxu0
      %v722 = vadd.f32 0.0, %v721
      %723 = vdwg.mxu0
      %v724 = vsel %vm285, 1, 0
      %v725 = vsel %vm286, 1, 0
      %v726 = vsel %vm287, 1, 0
      %v727 = vsel %vm288, 1, 0
      %vm728 = vcmp.eq.s32.totalorder %v724, 1
      %vm729 = vcmp.eq.s32.totalorder %v725, 1
      %vm730 = vcmp.eq.s32.totalorder %v726, 1
      %vm731 = vcmp.eq.s32.totalorder %v727, 1
      %v736 = vrot.slane %v637, 4
      %v737 = vrot.slane %v639, 4
      %v738 = vrot.slane %v714, 4
      %v739 = vrot.slane %v716, 4
      %v744 = vsel %vm728, %v637, %v736
      %v745 = vsel %vm729, %v639, %v737
      %v746 = vsel %vm730, %v714, %v738
      %v747 = vsel %vm731, %v716, %v739
      %v752 = vrot.slane %v643, 4
      %v753 = vrot.slane %v645, 4
      %v754 = vrot.slane %v720, 4
      %v755 = vrot.slane %v722, 4
      %v760 = vsel %vm728, %v643, %v752
      %v761 = vsel %vm729, %v645, %v753
      %v762 = vsel %vm730, %v720, %v754
      %v763 = vsel %vm731, %v722, %v755
      %v764 = vsel %vm337, 1, 0
      %v765 = vsel %vm338, 1, 0
      %v766 = vsel %vm339, 1, 0
      %v767 = vsel %vm340, 1, 0
      %vm768 = vcmp.eq.s32.totalorder %v764, 1
      %vm769 = vcmp.eq.s32.totalorder %v765, 1
      %vm770 = vcmp.eq.s32.totalorder %v766, 1
      %vm771 = vcmp.eq.s32.totalorder %v767, 1
      %v772 = vsel %vm768, %v760, %v744
      %v773 = vsel %vm769, %v761, %v745
      %v774 = vsel %vm770, %v762, %v746
      %v775 = vsel %vm771, %v763, %v747
      %v776 = vld [vmem:[%s3] sm:$0xff]
      %v777 = vld [vmem:[%s3 + $0x8] sm:$0xff]
      %v780 = vcombine.low %v776, %v776
      %v781 = vcombine.low %v777, %v777
      %v784 = vadd.f32 %v772, %v780
      %v785 = vadd.f32 %v773, %v776
      %v786 = vadd.f32 %v774, %v781
      %v787 = vadd.f32 %v775, %v777
      %v788 = vsub.f32 0.0, %v784
      %v789 = vsub.f32 0.0, %v785
      %v790 = vsub.f32 0.0, %v786
      %v791 = vsub.f32 0.0, %v787
      %v792 = vmul.f32 %v788, 1.442695
      %v793 = vpow.pop %v792
      %v794 = vmul.f32 %v789, 1.442695
      %v795 = vpow.pop %v794
      %v796 = vmul.f32 %v790, 1.442695
      %v797 = vpow.pop %v796
      %v798 = vmul.f32 %v791, 1.442695
      %v799 = vpow.pop %v798
      %v800 = vadd.f32 %v793, 1.0
      %v801 = vadd.f32 %v795, 1.0
      %v802 = vadd.f32 %v797, 1.0
      %v803 = vadd.f32 %v799, 1.0
      %v804 = vrcp.pop %v800
      %v805 = vrcp.pop %v801
      %v806 = vrcp.pop %v802
      %v807 = vrcp.pop %v803
      %v808 = vmul.f32 %v784, %v804
      %v809 = vmul.f32 %v785, %v805
      %v810 = vmul.f32 %v786, %v806
      %v811 = vmul.f32 %v787, %v807
      %v816 = vcombine.high %v808, %v809
      %v817 = vcombine.high %v810, %v811
      %820 = vst [vmem:[%s230] sm:$0xff] %v816
      %821 = vst [vmem:[%s230 + $0x8] sm:$0xff] %v817
      %s822 = smul.u32 4, %s20
      %p823 = scmp.lt.s32.totalorder %s19, 1
      %s824 = scalar_select %p823, %s19, 1
      %p825 = scmp.lt.s32.totalorder %s822, 7
      %s826 = scalar_select %p825, %s822, 7
      %s827 = smul.addr %s824, 8
      %s828 = sadd.s32 %s826, %s827
      %s829 = smul.addr %s828, 4
      %s830 = scalar_lea.vmem %s4, %s829
      // Predicated region
      $region37: #{upsampler_pallas.1} parent=35 // pred_check
        %p831 = pneg %p138
      $region38: #{upsampler_pallas.1} parent=35 // pred_check_branch
        %833 = sbr.rel (%p831) target = $region40
      $region39: #{upsampler_pallas.1} parent=35 // pred_region
        %s834 = smul.u32 4, %s20
      $region40: #{upsampler_pallas.1} parent=35 // pred_fallthru
        _
    $region36: #{upsampler_pallas.1} parent=5 // pred_fallthru
      _
    %p835 = scmp.le.s32.totalorder 2, %s10
    // Predicated region
    $region41: #{upsampler_pallas.1} parent=5 // pred_check
      %p836 = pneg %p835
    $region42: #{upsampler_pallas.1} parent=5 // pred_check_branch
      %838 = sbr.rel (%p836) target = $region44
    $region43: #{upsampler_pallas.1} parent=5 // pred_region
      %s839 = ssub.s32 %s10, 2
      // Predicated region
      $region45: #{upsampler_pallas.1} parent=43 // pred_check
        %p840 = pneg %p144
      $region46: #{upsampler_pallas.1} parent=43 // pred_check_branch
        %842 = sbr.rel (%p840) target = $region48
      $region47: #{upsampler_pallas.1} parent=43 // pred_region
        %s843 = smul.u32 4, %s22
        %p844 = scmp.lt.s32.totalorder %s21, 1
        %s845 = scalar_select %p844, %s21, 1
        %p846 = scmp.lt.s32.totalorder %s843, 7
        %s847 = scalar_select %p846, %s843, 7
        %s848 = smul.addr %s845, 8
        %s849 = sadd.s32 %s847, %s848
        %s850 = smul.addr %s849, 4
        %s851 = scalar_lea.vmem %s4, %s850
      $region48: #{upsampler_pallas.1} parent=43 // pred_fallthru
        _
    $region44: #{upsampler_pallas.1} parent=5 // pred_fallthru
      _
  $region6: #{upsampler_pallas.1} parent=0 // loop_footer
    %s14 = sadd.s32 1, %s10
  $region7: #{upsampler_pallas.1} parent=0 // loop_footer_branch
    %9 = sbr.rel target = $region3
  $region8: #{upsampler_pallas.1} parent=0 // loop_exit
    _

</llo_original>
